<compile_context>
chip_gen: v6e
topology: v6e:2x2x1
jax: 0.10.0
libtpu: 0.0.40
codegen_flags: <defaults>
</compile_context>

<pallas_src>
from functools import partial

import jax
import jax.numpy as jnp
from jax.experimental import pallas as pl
from jax.experimental.pallas import tpu as pltpu


def _round_up(x, m):
    return ((x + m - 1) // m) * m


def _sample_embedding_kernel(x_ref, w_ref, o_ref, acc_ref, *, tk, weight_resident):
    # x_ref:   VMEM [TILE_N, TILE_K]            bf16 features tile
    # w_ref:   VMEM [IN_PAD, OUT_PAD] (resident) or [TILE_K, OUT_PAD] (streamed)
    # o_ref:   VMEM [TILE_N, OUT_PAD]            lane-dense output tile (f32)
    # acc_ref: VMEM [TILE_N, OUT_PAD]            f32 accumulator scratch
    k = pl.program_id(1)

    if weight_resident:
        # Whole (pre-scaled, padded) weight lives in VMEM; slice the K chunk here.
        k_start = pl.multiple_of(k * tk, 128)
        w = w_ref[pl.ds(k_start, tk), :]
    else:
        w = w_ref[...]

    part = jnp.dot(x_ref[...], w, preferred_element_type=jnp.float32)

    @pl.when(k == 0)
    def _():
        acc_ref[...] = part            # direct write: no zero-fill pass

    @pl.when(k != 0)
    def _():
        acc_ref[...] = acc_ref[...] + part

    @pl.when(k == pl.num_programs(1) - 1)
    def _():
        o_ref[...] = acc_ref[...].astype(o_ref.dtype)


def prepare_sample_embedding_weight(weight, controller, *, compute_dtype=jnp.bfloat16):
    """One-time 'init' transform of the PyTorch Linear weight [out_dim, in_dim]:
    transpose -> fold 1/controller -> pad K and out to multiples of 128 -> cast."""
    out_dim, in_dim = weight.shape
    w_t = jnp.transpose(weight).astype(jnp.float32) * (1.0 / jnp.float32(controller))
    in_pad = _round_up(in_dim, 128)
    out_pad = _round_up(out_dim, 128)
    w_t = jnp.pad(w_t, ((0, in_pad - in_dim), (0, out_pad - out_dim)))
    return w_t.astype(compute_dtype)


def sample_embedding_forward(features, weight_prepared, out_dim, *,
                             tile_n=1024, max_tile_k=2048,
                             out_dtype=jnp.float32,
                             resident_weight_bytes=2 * 1024 * 1024):
    """features: [N, in_dim]; weight_prepared: [in_pad, out_pad] from
    prepare_sample_embedding_weight (pre-transposed, 1/controller folded, padded)."""
    N, in_dim = features.shape
    in_pad, out_pad = weight_prepared.shape
    assert in_pad >= in_dim and in_pad % 128 == 0 and out_pad % 128 == 0
    compute_dtype = weight_prepared.dtype

    # ---- Row tiling (tn multiple of 16 for bf16 sublane tiling) ----
    if N <= tile_n:
        # >=2 row tiles when worthwhile so v7x megacore can shard the row axis.
        splits = 2 if N >= 32 else 1
        tn = _round_up(pl.cdiv(N, splits), 16)
        grid_n = pl.cdiv(N, tn)
        n_rows = tn * grid_n           # tiny zero-pad, sliced off at the end
    else:
        tn = _round_up(tile_n, 16)
        grid_n = pl.cdiv(N, tn)
        n_rows = N                     # ragged last tile: output store is masked

    # ---- K tiling (in_pad is a multiple of 128, so a clean tk always exists) ----
    if in_pad <= max_tile_k:
        tk = in_pad
    else:
        tk = 128
        for cand in (2048, 1024, 512, 256):
            if cand <= max_tile_k and in_pad % cand == 0:
                tk = cand
                break
    grid_k = in_pad // tk

    # ---- Prepare features: cast to compute dtype, pad rows / K if needed ----
    x = features if features.dtype == compute_dtype else features.astype(compute_dtype)
    pad_rows = n_rows - N
    pad_k = in_pad - in_dim
    if pad_rows or pad_k:
        x = jnp.pad(x, ((0, pad_rows), (0, pad_k)))

    # ---- Weight spec: VMEM-resident (fetched once) vs streamed per K chunk ----
    weight_bytes = in_pad * out_pad * jnp.dtype(compute_dtype).itemsize
    weight_resident = weight_bytes <= resident_weight_bytes
    if weight_resident:
        w_spec = pl.BlockSpec((in_pad, out_pad), lambda i, k: (0, 0))
    else:
        w_spec = pl.BlockSpec((tk, out_pad), lambda i, k: (k, 0))

    kernel = partial(_sample_embedding_kernel, tk=tk, weight_resident=weight_resident)

    out_padded = pl.pallas_call(
        kernel,
        out_shape=jax.ShapeDtypeStruct((n_rows, out_pad), out_dtype),
        grid_spec=pltpu.PrefetchScalarGridSpec(
            num_scalar_prefetch=0,
            grid=(grid_n, grid_k),
            in_specs=[
                pl.BlockSpec((tn, tk), lambda i, k: (i, k)),   # features
                w_spec,                                        # weight
            ],
            out_specs=pl.BlockSpec((tn, out_pad), lambda i, k: (i, 0)),
            scratch_shapes=[pltpu.VMEM((tn, out_pad), jnp.float32)],
        ),
        compiler_params=pltpu.CompilerParams(
            dimension_semantics=("parallel", "arbitrary"),
            vmem_limit_bytes=48 * 1024 * 1024,   # lets v5e (16 MiB default) use big tiles
        ),
    )(x, weight_prepared)

    # Skip the extra output-sized HBM pass when no padding was introduced.
    if n_rows != N or out_pad != out_dim:
        return out_padded[:N, :out_dim]
    return out_padded


if __name__ == "__main__":
    # Small shapes consistent with the module (N samples, in_dim features -> out_dim
    # embedding).  At this toy size the pallas_call is pure dispatch overhead; it is
    # exercised for correctness -- the kernel targets production-sized N/in_dim.
    N, in_dim, out_dim = 8, 32, 8
    controller = 40.0

    key = jax.random.PRNGKey(0)
    k_feat, k_w = jax.random.split(key)
    features = jax.random.normal(k_feat, (N, in_dim), dtype=jnp.float32)
    # init.normal_(W, mean=0.0, std=0.1) in PyTorch layout [out_dim, in_dim] ...
    weight = 0.1 * jax.random.normal(k_w, (out_dim, in_dim), dtype=jnp.float32)
    # ... stored pre-transposed, pre-scaled, padded and cast ONCE at "init".
    w_prep = prepare_sample_embedding_weight(weight, controller)

    out = sample_embedding_forward(features, w_prep, out_dim)
    out = jax.block_until_ready(out)

    # Reference 1: same bf16 operands the kernel consumes, f32 accumulation (tight).
    x_bf = features.astype(jnp.bfloat16).astype(jnp.float32)
    w_bf = w_prep[:in_dim, :out_dim].astype(jnp.float32)
    ref_same_precision = x_bf @ w_bf
    # Reference 2: exact PyTorch forward math in f32 (loose, bf16 rounding only).
    ref_f32 = (features / controller) @ weight.T

    assert out.shape == (N, out_dim)
    assert out.dtype == jnp.float32
    assert jnp.allclose(out, ref_same_precision, atol=1e-5, rtol=1e-5)
    assert jnp.allclose(out, ref_f32, atol=2e-3, rtol=2e-2)

    print("KERNEL_OK")
</pallas_src>

<mosaic_0001>
module attributes {stable_mosaic.version = 11 : i64} {
  func.func @_sample_embedding_kernel(%arg0: i32, %arg1: i32, %arg2: memref<16x128xbf16, #tpu.memory_space<vmem>>, %arg3: memref<128x128xbf16, #tpu.memory_space<vmem>>, %arg4: memref<16x128xf32, #tpu.memory_space<vmem>>, %arg5: memref<16x128xf32, #tpu.memory_space<vmem>>) attributes {dimension_semantics = [#tpu.dimension_semantics<parallel>, #tpu.dimension_semantics<arbitrary>], iteration_bounds = array<i64: 1, 1>, scalar_prefetch = 0 : i64, scratch_operands = 1 : i64, tpu.core_type = #tpu.core_type<tc>, window_params = [{transform_indices = @transform_0, window_bounds = array<i64: 16, 128>}, {pipeline_mode = #tpu.pipeline_mode<synchronous>, transform_indices = @transform_1, window_bounds = array<i64: 128, 128>}, {transform_indices = @transform_2, window_bounds = array<i64: 16, 128>}]} {
    %c128_i32 = arith.constant 128 : i32
    %0 = arith.muli %arg1, %c128_i32 : i32
    %1 = tpu.assume_multiple %0, 128 : i32
    %2 = arith.index_cast %1 : i32 to index
    %c0 = arith.constant 0 : index
    %3 = vector.load %arg3[%2, %c0] : memref<128x128xbf16, #tpu.memory_space<vmem>>, vector<128x128xbf16>
    %c0_0 = arith.constant 0 : index
    %c0_1 = arith.constant 0 : index
    %4 = vector.load %arg2[%c0_0, %c0_1] : memref<16x128xbf16, #tpu.memory_space<vmem>>, vector<16x128xbf16>
    %cst = arith.constant dense<0.000000e+00> : vector<16x128xf32>
    %5 = tpu.matmul %4, %3, %cst {dimension_numbers = #tpu.dot_dimension_numbers<[1], [0], [0], [1], [0, 0, 1, 1], [], []>} : vector<16x128xbf16>, vector<128x128xbf16>, vector<16x128xf32> -> vector<16x128xf32>
    %c0_i32 = arith.constant 0 : i32
    %6 = arith.cmpi eq, %arg1, %c0_i32 : i32
    %7 = arith.extui %6 : i1 to i32
    %c0_i32_2 = arith.constant 0 : i32
    %8 = arith.cmpi ne, %7, %c0_i32_2 : i32
    scf.if %8 {
      %c0_7 = arith.constant 0 : index
      %c0_8 = arith.constant 0 : index
      %15 = vector.load %arg5[%c0_7, %c0_8] : memref<16x128xf32, #tpu.memory_space<vmem>>, vector<16x128xf32>
      tpu.vector_store %arg5[%c0_7, %c0_8], %5 {strides = array<i32>} : memref<16x128xf32, #tpu.memory_space<vmem>>, vector<16x128xf32>,
    } else {
    }
    %c0_i32_3 = arith.constant 0 : i32
    %9 = arith.cmpi ne, %arg1, %c0_i32_3 : i32
    %10 = arith.extui %9 : i1 to i32
    %c0_i32_4 = arith.constant 0 : i32
    %11 = arith.cmpi ne, %10, %c0_i32_4 : i32
    scf.if %11 {
      %c0_7 = arith.constant 0 : index
      %c0_8 = arith.constant 0 : index
      %15 = vector.load %arg5[%c0_7, %c0_8] : memref<16x128xf32, #tpu.memory_space<vmem>>, vector<16x128xf32>
      %16 = arith.addf %15, %5 : vector<16x128xf32>
      %c0_9 = arith.constant 0 : index
      %c0_10 = arith.constant 0 : index
      %17 = vector.load %arg5[%c0_9, %c0_10] : memref<16x128xf32, #tpu.memory_space<vmem>>, vector<16x128xf32>
      tpu.vector_store %arg5[%c0_9, %c0_10], %16 {strides = array<i32>} : memref<16x128xf32, #tpu.memory_space<vmem>>, vector<16x128xf32>,
    } else {
    }
    %c0_i32_5 = arith.constant 0 : i32
    %12 = arith.cmpi eq, %arg1, %c0_i32_5 : i32
    %13 = arith.extui %12 : i1 to i32
    %c0_i32_6 = arith.constant 0 : i32
    %14 = arith.cmpi ne, %13, %c0_i32_6 : i32
    scf.if %14 {
      %c0_7 = arith.constant 0 : index
      %c0_8 = arith.constant 0 : index
      %15 = vector.load %arg5[%c0_7, %c0_8] : memref<16x128xf32, #tpu.memory_space<vmem>>, vector<16x128xf32>
      %c0_9 = arith.constant 0 : index
      %c0_10 = arith.constant 0 : index
      %16 = vector.load %arg4[%c0_9, %c0_10] : memref<16x128xf32, #tpu.memory_space<vmem>>, vector<16x128xf32>
      tpu.vector_store %arg4[%c0_9, %c0_10], %15 {strides = array<i32>} : memref<16x128xf32, #tpu.memory_space<vmem>>, vector<16x128xf32>,
    } else {
    }
    return
  }
  func.func @transform_0(%arg0: i32, %arg1: i32) -> (i32, i32) {
    %c0_i32 = arith.constant 0 : i32
    return %arg0, %arg1 : i32, i32
  }
  func.func @transform_1(%arg0: i32, %arg1: i32) -> (i32, i32) {
    %c0_i32 = arith.constant 0 : i32
    %c0_i32_0 = arith.constant 0 : i32
    %c0_i32_1 = arith.constant 0 : i32
    return %c0_i32, %c0_i32_0 : i32, i32
  }
  func.func @transform_2(%arg0: i32, %arg1: i32) -> (i32, i32) {
    %c0_i32 = arith.constant 0 : i32
    %c0_i32_0 = arith.constant 0 : i32
    return %arg0, %c0_i32 : i32, i32
  }
}

</mosaic_0001>

<llo_original>
// kernel: tpu_custom_call.1
$region0: #{tpu_custom_call.1}
  #allocation0 [shape = 'u32[]', space=smem, size = 0x4, offset = 0x4, fixed_abs, tag = 'smem constant byte address 0x4 - core index']
  #allocation1 [shape = 'u32[144,128]{1,0:T(1,128)}', space=vmem, size = 0x12000, scoped, tag = 'internal scratch']
  #allocation2 [shape = 'f32[16,128]{1,0:T(8,128)}', space=vmem, size = 0x2000, scoped, tag = 'scratch operand']
  %s0 = inlined_call_operand.hbm [shape: bf16[16,128], index: 0, kind: input, shape index: {}]
  %s1 = inlined_call_operand.hbm [shape: bf16[128,128], index: 1, kind: input, shape index: {}]
  %s2 = inlined_call_operand.hbm [shape: f32[16,128], index: 2, kind: output, shape index: {}]
  %s3 = sld [smem:[#allocation0]]
  $region38: #{tpu_custom_call.1} parent=0
    _
  %s5 = ssub.s32 1, %s3
  %s6 = scalar_select 0, %s5, %s3
  $region1: #{tpu_custom_call.1} parent=0
    #allocation3 [shape = 'u8[4096]{0}', space=vmem, size = 0x1000, scoped, tag = 'input window, operand 0, single buffered']
    #allocation4 [shape = 's32[1]{0}', space=sflag, size = 0x4, scoped, tag = 'scoped memory for tpu_custom_call.1']
    #allocation5 [shape = 's32[1]{0}', space=sflag, size = 0x4, scoped, tag = 'scoped memory for tpu_custom_call.1']
    #allocation6 [shape = 'u8[32768]{0}', space=vmem, size = 0x8000, scoped, tag = 'input window, operand 1, single buffered']
    #allocation7 [shape = 's32[1]{0}', space=sflag, size = 0x4, scoped, tag = 'scoped memory for tpu_custom_call.1']
    #allocation8 [shape = 'u8[8192]{0}', space=vmem, size = 0x2000, scoped, tag = 'output window, operand 0, single buffered']
    %7 = vsyncpa [#allocation4], 0
    %8 = vsyncpa [#allocation7], 0
    %9 = vsyncpa [#allocation5], 0
    // Predicated region
    $region2: #{tpu_custom_call.1} parent=1 // pred_check
      _
    $region3: #{tpu_custom_call.1} parent=1 // pred_check_branch
      %11 = sbr.rel (0) target = $region5
    $region4: #{tpu_custom_call.1} parent=1 // pred_region
      %s13 = ssub.s32 128, 128
      %14 = vsyncadd [#allocation4], %s13
      %s15 = sshll.u32 [#allocation3], 4
      %s16 = int_to_ptr.vmem [resolvable:$true] %s15
      %21 = dma.hbm_to_vmem [thread:$0]  %s0, 128, %s16, [#allocation4], 64, 64, 4
    $region5: #{tpu_custom_call.1} parent=1 // pred_fallthru
      _
    // Predicated region
    $region6: #{tpu_custom_call.1} parent=1 // pred_check
      _
    $region7: #{tpu_custom_call.1} parent=1 // pred_check_branch
      %23 = sbr.rel (0) target = $region9
    $region8: #{tpu_custom_call.1} parent=1 // pred_region
      %s25 = ssub.s32 1024, 1024
      %26 = vsyncadd [#allocation7], %s25
      %s27 = sshll.u32 [#allocation6], 4
      %s28 = int_to_ptr.vmem [resolvable:$true] %s27
      %33 = dma.hbm_to_vmem [thread:$0]  %s1, 1024, %s28, [#allocation7], 64, 64, 4
    $region9: #{tpu_custom_call.1} parent=1 // pred_fallthru
      _
    // Predicated region
    $region10: #{tpu_custom_call.1} parent=1 // pred_check
      _
    $region11: #{tpu_custom_call.1} parent=1 // pred_check_branch
      %35 = sbr.rel (0) target = $region13
    $region12: #{tpu_custom_call.1} parent=1 // pred_region
      %36 = dma.done [#allocation4], 128
    $region13: #{tpu_custom_call.1} parent=1 // pred_fallthru
      _
    // Predicated region
    $region14: #{tpu_custom_call.1} parent=1 // pred_check
      _
    $region15: #{tpu_custom_call.1} parent=1 // pred_check_branch
      %38 = sbr.rel (0) target = $region17
    $region16: #{tpu_custom_call.1} parent=1 // pred_region
      %39 = dma.done [#allocation7], 1024
    $region17: #{tpu_custom_call.1} parent=1 // pred_fallthru
      _
    %s41 = smul.u32 0, 128
    %s42 = sshra.s32 %s41, 3
    %s43 = sand.u32 %s41, 7
    %s44 = smul.addr %s42, 4
    %s45 = scalar_lea.vmem [#allocation6], %s44
    %v46 = vld [vmem:[%s45] sm:$0xf]
    %v47 = vld [vmem:[%s45 + $0x4] sm:$0xf]
    %v48 = vld [vmem:[%s45 + $0x8] sm:$0xf]
    %v49 = vld [vmem:[%s45 + $0xc] sm:$0xf]
    %v50 = vld [vmem:[%s45 + $0x10] sm:$0xf]
    %v51 = vld [vmem:[%s45 + $0x14] sm:$0xf]
    %v52 = vld [vmem:[%s45 + $0x18] sm:$0xf]
    %v53 = vld [vmem:[%s45 + $0x1c] sm:$0xf]
    %v54 = vld [vmem:[%s45 + $0x20] sm:$0xf]
    %v55 = vld [vmem:[%s45 + $0x24] sm:$0xf]
    %v56 = vld [vmem:[%s45 + $0x28] sm:$0xf]
    %v57 = vld [vmem:[%s45 + $0x2c] sm:$0xf]
    %v58 = vld [vmem:[%s45 + $0x30] sm:$0xf]
    %v59 = vld [vmem:[%s45 + $0x34] sm:$0xf]
    %v60 = vld [vmem:[%s45 + $0x38] sm:$0xf]
    %v61 = vld [vmem:[%s45 + $0x3c] sm:$0xf]
    %v62 = vld [vmem:[#allocation3] sm:$0xf]
    %v63 = vld [vmem:[#allocation3 + $0x4] sm:$0xf]
    %v66 = vunpack.c.l.b16 %v62
    %v67 = vunpack.c.l.b16 %v63
    %v68 = vpack.c.b16 %v67, %v66
    %v86 = vunpack.c.l.b16 %v46
    %v87 = vunpack.c.l.b16 %v47
    %v88 = vunpack.c.l.b16 %v48
    %v89 = vunpack.c.l.b16 %v49
    %v90 = vunpack.c.l.b16 %v50
    %v91 = vunpack.c.l.b16 %v51
    %v92 = vunpack.c.l.b16 %v52
    %v93 = vunpack.c.l.b16 %v53
    %v94 = vunpack.c.l.b16 %v54
    %v95 = vunpack.c.l.b16 %v55
    %v96 = vunpack.c.l.b16 %v56
    %v97 = vunpack.c.l.b16 %v57
    %v98 = vunpack.c.l.b16 %v58
    %v99 = vunpack.c.l.b16 %v59
    %v100 = vunpack.c.l.b16 %v60
    %v101 = vunpack.c.l.b16 %v61
    %v102 = vpack.c.b16 %v87, %v86
    %v103 = vpack.c.b16 %v89, %v88
    %v104 = vpack.c.b16 %v91, %v90
    %v105 = vpack.c.b16 %v93, %v92
    %v106 = vpack.c.b16 %v95, %v94
    %v107 = vpack.c.b16 %v97, %v96
    %v108 = vpack.c.b16 %v99, %v98
    %v109 = vpack.c.b16 %v101, %v100
    %118 = vmatprep.subr.bf16.mxu0 0
    %119 = vmatpush1.bf16.msra.mxu0 %v109
    %120 = vmatprep.subr.bf16.mxu0 0
    %121 = vmatpush1.bf16.msra.mxu0 %v108
    %122 = vmatprep.subr.bf16.mxu0 0
    %123 = vmatpush1.bf16.msra.mxu0 %v107
    %124 = vmatprep.subr.bf16.mxu0 0
    %125 = vmatpush1.bf16.msra.mxu0 %v106
    %126 = vmatprep.subr.bf16.mxu0 0
    %127 = vmatpush1.bf16.msra.mxu0 %v105
    %128 = vmatprep.subr.bf16.mxu0 0
    %129 = vmatpush1.bf16.msra.mxu0 %v104
    %130 = vmatprep.subr.bf16.mxu0 0
    %131 = vmatpush1.bf16.msra.mxu0 %v103
    %132 = vmatprep.subr.bf16.mxu0 0
    %133 = vmatpush1.bf16.msra.mxu0 %v102
    %134 = vmatprep.subr.bf16.mxu0 0
    %135 = vmatpush2.bf16.msra.mxu0 0
    %136 = vmatprep.subr.bf16.mxu0 0
    %137 = vmatpush2.bf16.msra.mxu0 0
    %138 = vmatprep.subr.bf16.mxu0 0
    %139 = vmatpush2.bf16.msra.mxu0 0
    %140 = vmatprep.subr.bf16.mxu0 0
    %141 = vmatpush2.bf16.msra.mxu0 0
    %142 = vmatprep.subr.bf16.mxu0 0
    %143 = vmatpush2.bf16.msra.mxu0 0
    %144 = vmatprep.subr.bf16.mxu0 0
    %145 = vmatpush2.bf16.msra.mxu0 0
    %146 = vmatprep.subr.bf16.mxu0 0
    %147 = vmatpush2.bf16.msra.mxu0 0
    %148 = vmatprep.subr.bf16.mxu0 0
    %149 = vmatpush2.bf16.msra.mxu0 0
    %150 = vmatprep.mubr.bf16.mxu0 0
    %151 = vmatmul.mubr.bf16.gmra.mxu0 %v68
    %v152 = vpop.f32.mrf.mxu0
    %v153 = vadd.f32 0.0, %v152
    %v154 = vpop.f32.mrf.mxu0
    %v155 = vpop.f32.mrf.mxu0
    %v156 = vadd.f32 0.0, %v155
    %v157 = vpop.f32.mrf.mxu0
    %158 = vdwg.mxu0
    %p159 = scmp.eq.s32.totalorder 0, 0
    // Predicated region
    $region18: #{tpu_custom_call.1} parent=1 // pred_check
      %p160 = pneg %p159
    $region19: #{tpu_custom_call.1} parent=1 // pred_check_branch
      %162 = sbr.rel (%p160) target = $region21
    $region20: #{tpu_custom_call.1} parent=1 // pred_region
      %163 = vst [vmem:[#allocation2] sm:$0xff] %v153
      %164 = vst [vmem:[#allocation2 + $0x8] sm:$0xff] %v156
    $region21: #{tpu_custom_call.1} parent=1 // pred_fallthru
      _
    %p165 = scmp.ne.s32.totalorder 0, 0
    // Predicated region
    $region22: #{tpu_custom_call.1} parent=1 // pred_check
      %p166 = pneg %p165
    $region23: #{tpu_custom_call.1} parent=1 // pred_check_branch
      %168 = sbr.rel (%p166) target = $region25
    $region24: #{tpu_custom_call.1} parent=1 // pred_region
      %v169 = vld [vmem:[#allocation2] sm:$0xff]
      %v170 = vld [vmem:[#allocation2 + $0x8] sm:$0xff]
      %v171 = vadd.f32 %v169, %v153
      %v172 = vadd.f32 %v170, %v156
      %173 = vst [vmem:[#allocation2] sm:$0xff] %v171
      %174 = vst [vmem:[#allocation2 + $0x8] sm:$0xff] %v172
    $region25: #{tpu_custom_call.1} parent=1 // pred_fallthru
      _
    // Predicated region
    $region26: #{tpu_custom_call.1} parent=1 // pred_check
      %p175 = pneg %p159
    $region27: #{tpu_custom_call.1} parent=1 // pred_check_branch
      %177 = sbr.rel (%p175) target = $region29
    $region28: #{tpu_custom_call.1} parent=1 // pred_region
      %v178 = vld [vmem:[#allocation2] sm:$0xff]
      %v179 = vld [vmem:[#allocation2 + $0x8] sm:$0xff]
      %180 = vst [vmem:[#allocation8] sm:$0xff] %v178
      %181 = vst [vmem:[#allocation8 + $0x8] sm:$0xff] %v179
    $region29: #{tpu_custom_call.1} parent=1 // pred_fallthru
      _
    // Predicated region
    $region30: #{tpu_custom_call.1} parent=1 // pred_check
      _
    $region31: #{tpu_custom_call.1} parent=1 // pred_check_branch
      %183 = sbr.rel (0) target = $region33
    $region32: #{tpu_custom_call.1} parent=1 // pred_region
      %s185 = ssub.s32 256, 256
      %186 = vsyncadd [#allocation5], %s185
      %s187 = sshll.u32 [#allocation8], 4
      %s188 = int_to_ptr.vmem [resolvable:$true] %s187
      %193 = dma.vmem_to_hbm [thread:$0]  %s188, 256, %s2, [#allocation5], 128, 128, 8
    $region33: #{tpu_custom_call.1} parent=1 // pred_fallthru
      _
    // Predicated region
    $region34: #{tpu_custom_call.1} parent=1 // pred_check
      _
    $region35: #{tpu_custom_call.1} parent=1 // pred_check_branch
      %195 = sbr.rel (0) target = $region37
    $region36: #{tpu_custom_call.1} parent=1 // pred_region
      %196 = dma.done [#allocation5], 256
    $region37: #{tpu_custom_call.1} parent=1 // pred_fallthru
      _
    %197 = vsyncpa [#allocation4], 1
    %198 = vsyncpa [#allocation7], 1
    %199 = vsyncpa [#allocation5], 1

</llo_original>
